<compile_context>
chip_gen: v7x
topology: tpu7x:2x2x1
jax: 0.10.0
libtpu: 0.0.40
codegen_flags: <defaults>
</compile_context>

<pallas_src>
import functools

import jax
import jax.numpy as jnp
from jax import lax
from jax.experimental import pallas as pl
from jax.experimental.pallas import tpu as pltpu


def _round_up(x, m):
    return ((x + m - 1) // m) * m


def _compiler_params(dim_sem, est_bytes):
    # Raise the scoped-VMEM limit only when the estimate exceeds the most
    # conservative default (16 MiB on v5e); cap below v7x's 64 MiB physical.
    vmem = None
    if est_bytes > 12 * (1 << 20):
        vmem = min(int(est_bytes * 1.3) + (2 << 20), 60 * (1 << 20))
    return pltpu.CompilerParams(dimension_semantics=dim_sem,
                                vmem_limit_bytes=vmem)


# --------------------------------------------------------------------------
# Stage 1: fused Q/K/V projections over row tiles of the flattened (B*S, H).
# --------------------------------------------------------------------------
def _qkv_proj_kernel(xq_ref, xk_ref, xv_ref,
                     wq_ref, bq_ref, wk_ref, bk_ref, wv_ref, bv_ref,
                     q_out, k_out, v_out, *, scale):
    q = jnp.dot(xq_ref[...], wq_ref[...],
                preferred_element_type=jnp.float32) + bq_ref[...]
    k = jnp.dot(xk_ref[...], wk_ref[...],
                preferred_element_type=jnp.float32) + bk_ref[...]
    v = jnp.dot(xv_ref[...], wv_ref[...],
                preferred_element_type=jnp.float32) + bv_ref[...]
    # Fold the 1/sqrt(head_dim) softmax scale into Q (cheaper than scaling
    # the (tq, band) scores per head downstream).
    q_out[...] = (q * scale).astype(q_out.dtype)
    k_out[...] = k.astype(k_out.dtype)
    v_out[...] = v.astype(v_out.dtype)


# --------------------------------------------------------------------------
# Stage 2+3 fused: windowed local attention + output projection per q-tile.
# --------------------------------------------------------------------------
def _local_attn_out_kernel(q_ref, k_ref, v_ref, wo_ref, bo_ref, o_ref, ctx_ref,
                           *, window_size, num_heads, head_dim, seq_len,
                           q_tile, band):
    qi = pl.program_id(1)
    q0 = qi * q_tile

    q = q_ref[...]                                  # (q_tile, H) bf16, scaled

    if band == seq_len:
        start = 0
        k_band = k_ref[...]                         # (S, H)
        v_band = v_ref[...]
    else:
        # Band covering [q0 - w, q0 + q_tile + w), start aligned down to 8
        # sublanes, clamped so start + band <= S.
        start = jnp.minimum((jnp.maximum(q0 - window_size, 0) // 8) * 8,
                            seq_len - band)
        k_band = k_ref[pl.ds(start, band), :]       # (band, H)
        v_band = v_ref[pl.ds(start, band), :]

    # Window mask only over the (q_tile, band) band — O(S*(tq+2w)), not O(S^2).
    rows = q0 + lax.broadcasted_iota(jnp.int32, (q_tile, band), 0)
    cols = start + lax.broadcasted_iota(jnp.int32, (q_tile, band), 1)
    in_win = jnp.abs(rows - cols) <= window_size

    for h in range(num_heads):
        sl = slice(h * head_dim, (h + 1) * head_dim)
        # scores = q_h @ k_h^T, f32 accumulation on the MXU.
        s = lax.dot_general(q[:, sl], k_band[:, sl], (((1,), (1,)), ((), ())),
                            preferred_element_type=jnp.float32)
        s = jnp.where(in_win, s, -1e9)
        m = jnp.max(s, axis=-1, keepdims=True)
        p = jnp.exp(s - m)
        l = jnp.sum(p, axis=-1, keepdims=True)
        pv = jnp.dot(p.astype(v_band.dtype), v_band[:, sl],
                     preferred_element_type=jnp.float32)
        # Normalize AFTER the PV matmul: (q_tile, d) multiply, not (q_tile, band).
        ctx_ref[:, sl] = pv * pl.reciprocal(l, approx=True)

    # Output projection: single GEMM with contraction dim = H, lane-dense store.
    out = jnp.dot(ctx_ref[...].astype(wo_ref.dtype), wo_ref[...],
                  preferred_element_type=jnp.float32) + bo_ref[...]
    o_ref[...] = out.astype(o_ref.dtype)


def self_local_attention(value, key, query, params, *, window_size, num_heads):
    """value/key/query: (B, S, H). Returns (B, S, H) in query.dtype."""
    B, S, H = query.shape
    assert H % num_heads == 0
    d = H // num_heads
    BS = B * S
    out_dtype = query.dtype
    cdt = jnp.bfloat16                  # MXU operand dtype (f32 accumulation)

    xq = query.reshape(BS, H).astype(cdt)
    xk = key.reshape(BS, H).astype(cdt)
    xv = value.reshape(BS, H).astype(cdt)
    wq, wk, wv, wo = (params[n].astype(cdt) for n in ("wq", "wk", "wv", "wo"))
    bq, bk, bv, bo = (params[n].astype(jnp.float32)
                      for n in ("bq", "bk", "bv", "bo"))

    # ---- Stage 1: fused QKV projection, tiled over rows of (B*S, H). ----
    tm = BS if BS <= 512 else 512
    row_spec = pl.BlockSpec((tm, H), lambda i: (i, 0))
    w_spec = pl.BlockSpec((H, H), lambda i: (0, 0))
    b_spec = pl.BlockSpec((1, H), lambda i: (0, 0))
    est1 = (2 * 3 * H * H * 2          # (H,H) bf16 weights, double-buffered
            + 2 * 3 * H * 4            # biases
            + 2 * 6 * tm * H * 2)      # 3 in + 3 out row tiles, double-buffered
    Q, K, V = pl.pallas_call(
        functools.partial(_qkv_proj_kernel, scale=1.0 / (d ** 0.5)),
        out_shape=tuple(jax.ShapeDtypeStruct((BS, H), cdt) for _ in range(3)),
        grid=(pl.cdiv(BS, tm),),
        in_specs=[row_spec, row_spec, row_spec,
                  w_spec, b_spec, w_spec, b_spec, w_spec, b_spec],
        out_specs=(row_spec, row_spec, row_spec),
        compiler_params=_compiler_params(("parallel",), est1),
    )(xq, xk, xv, wq, bq, wk, bk, wv, bv)
    # TODO(synk): for very large H add a K-reduction grid axis (f32 accumulator
    # scratch, axis "arbitrary") so the (H,H) weights are streamed in tk slabs.

    # Free reshapes only — no per-head transposes / extra HBM passes.
    Qb = Q.reshape(B, S, H)
    Kb = K.reshape(B, S, H)
    Vb = V.reshape(B, S, H)

    # ---- Stage 2+3 fused: windowed attention + output projection. ----
    q_tile = S if S <= 256 else 128
    band = min(S, _round_up(q_tile + 2 * window_size + 7, 8))
    n_q = pl.cdiv(S, q_tile)

    q_spec = pl.BlockSpec((None, q_tile, H), lambda b, qi: (b, qi, 0))
    kv_spec = pl.BlockSpec((None, S, H), lambda b, qi: (b, 0, 0))  # reused over qi
    wo_spec = pl.BlockSpec((H, H), lambda b, qi: (0, 0))
    bo_spec = pl.BlockSpec((1, H), lambda b, qi: (0, 0))
    o_spec = pl.BlockSpec((None, q_tile, H), lambda b, qi: (b, qi, 0))

    est2 = (2 * 2 * S * H * 2            # per-batch K, V slabs, double-buffered
            + 2 * 2 * q_tile * H * 2     # Q in + out tiles
            + 2 * (H * H * 2 + H * 4)    # wo, bo
            + 4 * q_tile * band * 4      # score / exp temps (f32)
            + q_tile * H * 4)            # ctx scratch
    # TODO(synk): for very large S*H (per-batch K/V slab > ~16 MiB) switch K/V
    # to manual band DMA (memory_space=pl.ANY + make_async_copy) instead of
    # whole-batch blocks.
    out = pl.pallas_call(
        functools.partial(_local_attn_out_kernel,
                          window_size=window_size, num_heads=num_heads,
                          head_dim=d, seq_len=S, q_tile=q_tile, band=band),
        out_shape=jax.ShapeDtypeStruct((B, S, H), out_dtype),
        grid=(B, n_q),
        in_specs=[q_spec, kv_spec, kv_spec, wo_spec, bo_spec],
        out_specs=o_spec,
        scratch_shapes=[pltpu.VMEM((q_tile, H), jnp.float32)],
        compiler_params=_compiler_params(("parallel", "arbitrary"), est2),
    )(Qb, Kb, Vb, wo, bo)
    return out


def _reference(value, key, query, params, *, window_size, num_heads):
    """Pure-JAX f32 reference mirroring the PyTorch forward (mask=None)."""
    B, S, H = query.shape
    d = H // num_heads
    Q = query @ params["wq"] + params["bq"][0]
    K = key @ params["wk"] + params["bk"][0]
    V = value @ params["wv"] + params["bv"][0]
    Q = Q.reshape(B, S, num_heads, d).transpose(0, 2, 1, 3)
    K = K.reshape(B, S, num_heads, d).transpose(0, 2, 1, 3)
    V = V.reshape(B, S, num_heads, d).transpose(0, 2, 1, 3)
    scores = jnp.einsum("bhqd,bhkd->bhqk", Q, K) / (d ** 0.5)
    idx = jnp.arange(S)
    lmask = jnp.abs(idx[:, None] - idx[None, :]) <= window_size
    scores = jnp.where(lmask[None, None], scores, -1e9)
    w = jax.nn.softmax(scores, axis=-1)
    out = jnp.einsum("bhqk,bhkd->bhqd", w, V)
    out = out.transpose(0, 2, 1, 3).reshape(B, S, H)
    return out @ params["wo"] + params["bo"][0]


def _init_params(rng, hidden):
    keys = jax.random.split(rng, 8)
    bound = 1.0 / (hidden ** 0.5)

    def u(k, shape):
        return jax.random.uniform(k, shape, jnp.float32, -bound, bound)

    return {
        "wq": u(keys[0], (hidden, hidden)), "bq": u(keys[1], (1, hidden)),
        "wk": u(keys[2], (hidden, hidden)), "bk": u(keys[3], (1, hidden)),
        "wv": u(keys[4], (hidden, hidden)), "bv": u(keys[5], (1, hidden)),
        "wo": u(keys[6], (hidden, hidden)), "bo": u(keys[7], (1, hidden)),
    }


if __name__ == "__main__":
    B, S, H = 2, 8, 32
    num_heads = 4
    window_size = 2

    root = jax.random.PRNGKey(0)
    kp, kq, kk, kv = jax.random.split(root, 4)
    params = _init_params(kp, H)
    query = jax.random.normal(kq, (B, S, H), jnp.float32)
    key = jax.random.normal(kk, (B, S, H), jnp.float32)
    value = jax.random.normal(kv, (B, S, H), jnp.float32)

    out = self_local_attention(value, key, query, params,
                               window_size=window_size, num_heads=num_heads)
    out = jax.block_until_ready(out)

    ref = _reference(value, key, query, params,
                     window_size=window_size, num_heads=num_heads)
    assert out.shape == (B, S, H)
    # Kernel uses bf16 MXU operands with f32 accumulation and an approx
    # reciprocal; compare to the f32 reference with a matching tolerance.
    assert jnp.allclose(out, ref, atol=3e-2, rtol=3e-2), "mismatch vs reference"
    print("KERNEL_OK")
</pallas_src>

<mosaic_0001>
module attributes {stable_mosaic.version = 11 : i64} {
  func.func @_qkv_proj_kernel(%arg0: i32, %arg1: memref<16x32xbf16, #tpu.memory_space<vmem>>, %arg2: memref<16x32xbf16, #tpu.memory_space<vmem>>, %arg3: memref<16x32xbf16, #tpu.memory_space<vmem>>, %arg4: memref<32x32xbf16, #tpu.memory_space<vmem>>, %arg5: memref<1x32xf32, #tpu.memory_space<vmem>>, %arg6: memref<32x32xbf16, #tpu.memory_space<vmem>>, %arg7: memref<1x32xf32, #tpu.memory_space<vmem>>, %arg8: memref<32x32xbf16, #tpu.memory_space<vmem>>, %arg9: memref<1x32xf32, #tpu.memory_space<vmem>>, %arg10: memref<16x32xbf16, #tpu.memory_space<vmem>>, %arg11: memref<16x32xbf16, #tpu.memory_space<vmem>>, %arg12: memref<16x32xbf16, #tpu.memory_space<vmem>>) attributes {dimension_semantics = [#tpu.dimension_semantics<parallel>], iteration_bounds = array<i64: 1>, scalar_prefetch = 0 : i64, scratch_operands = 0 : i64, tpu.core_type = #tpu.core_type<tc>, window_params = [{transform_indices = @transform_0, window_bounds = array<i64: 16, 32>}, {transform_indices = @transform_1, window_bounds = array<i64: 16, 32>}, {transform_indices = @transform_2, window_bounds = array<i64: 16, 32>}, {pipeline_mode = #tpu.pipeline_mode<synchronous>, transform_indices = @transform_3, window_bounds = array<i64: 32, 32>}, {pipeline_mode = #tpu.pipeline_mode<synchronous>, transform_indices = @transform_4, window_bounds = array<i64: 1, 32>}, {pipeline_mode = #tpu.pipeline_mode<synchronous>, transform_indices = @transform_5, window_bounds = array<i64: 32, 32>}, {pipeline_mode = #tpu.pipeline_mode<synchronous>, transform_indices = @transform_6, window_bounds = array<i64: 1, 32>}, {pipeline_mode = #tpu.pipeline_mode<synchronous>, transform_indices = @transform_7, window_bounds = array<i64: 32, 32>}, {pipeline_mode = #tpu.pipeline_mode<synchronous>, transform_indices = @transform_8, window_bounds = array<i64: 1, 32>}, {transform_indices = @transform_9, window_bounds = array<i64: 16, 32>}, {transform_indices = @transform_10, window_bounds = array<i64: 16, 32>}, {transform_indices = @transform_11, window_bounds = array<i64: 16, 32>}]} {
    %c0 = arith.constant 0 : index
    %c0_0 = arith.constant 0 : index
    %0 = vector.load %arg1[%c0, %c0_0] : memref<16x32xbf16, #tpu.memory_space<vmem>>, vector<16x32xbf16>
    %c0_1 = arith.constant 0 : index
    %c0_2 = arith.constant 0 : index
    %1 = vector.load %arg4[%c0_1, %c0_2] : memref<32x32xbf16, #tpu.memory_space<vmem>>, vector<32x32xbf16>
    %cst = arith.constant dense<0.000000e+00> : vector<16x32xf32>
    %2 = tpu.matmul %0, %1, %cst {dimension_numbers = #tpu.dot_dimension_numbers<[1], [0], [0], [1], [0, 0, 1, 1], [], []>} : vector<16x32xbf16>, vector<32x32xbf16>, vector<16x32xf32> -> vector<16x32xf32>
    %c0_3 = arith.constant 0 : index
    %c0_4 = arith.constant 0 : index
    %3 = vector.load %arg5[%c0_3, %c0_4] : memref<1x32xf32, #tpu.memory_space<vmem>>, vector<1x32xf32>
    %4 = vector.broadcast %3 : vector<1x32xf32> to vector<16x32xf32>
    %5 = arith.addf %2, %4 : vector<16x32xf32>
    %c0_5 = arith.constant 0 : index
    %c0_6 = arith.constant 0 : index
    %6 = vector.load %arg2[%c0_5, %c0_6] : memref<16x32xbf16, #tpu.memory_space<vmem>>, vector<16x32xbf16>
    %c0_7 = arith.constant 0 : index
    %c0_8 = arith.constant 0 : index
    %7 = vector.load %arg6[%c0_7, %c0_8] : memref<32x32xbf16, #tpu.memory_space<vmem>>, vector<32x32xbf16>
    %cst_9 = arith.constant dense<0.000000e+00> : vector<16x32xf32>
    %8 = tpu.matmul %6, %7, %cst_9 {dimension_numbers = #tpu.dot_dimension_numbers<[1], [0], [0], [1], [0, 0, 1, 1], [], []>} : vector<16x32xbf16>, vector<32x32xbf16>, vector<16x32xf32> -> vector<16x32xf32>
    %c0_10 = arith.constant 0 : index
    %c0_11 = arith.constant 0 : index
    %9 = vector.load %arg7[%c0_10, %c0_11] : memref<1x32xf32, #tpu.memory_space<vmem>>, vector<1x32xf32>
    %10 = vector.broadcast %9 : vector<1x32xf32> to vector<16x32xf32>
    %11 = arith.addf %8, %10 : vector<16x32xf32>
    %c0_12 = arith.constant 0 : index
    %c0_13 = arith.constant 0 : index
    %12 = vector.load %arg3[%c0_12, %c0_13] : memref<16x32xbf16, #tpu.memory_space<vmem>>, vector<16x32xbf16>
    %c0_14 = arith.constant 0 : index
    %c0_15 = arith.constant 0 : index
    %13 = vector.load %arg8[%c0_14, %c0_15] : memref<32x32xbf16, #tpu.memory_space<vmem>>, vector<32x32xbf16>
    %cst_16 = arith.constant dense<0.000000e+00> : vector<16x32xf32>
    %14 = tpu.matmul %12, %13, %cst_16 {dimension_numbers = #tpu.dot_dimension_numbers<[1], [0], [0], [1], [0, 0, 1, 1], [], []>} : vector<16x32xbf16>, vector<32x32xbf16>, vector<16x32xf32> -> vector<16x32xf32>
    %c0_17 = arith.constant 0 : index
    %c0_18 = arith.constant 0 : index
    %15 = vector.load %arg9[%c0_17, %c0_18] : memref<1x32xf32, #tpu.memory_space<vmem>>, vector<1x32xf32>
    %16 = vector.broadcast %15 : vector<1x32xf32> to vector<16x32xf32>
    %17 = arith.addf %14, %16 : vector<16x32xf32>
    %cst_19 = arith.constant 0.353553385 : f32
    %18 = vector.broadcast %cst_19 : f32 to vector<16x32xf32>
    %19 = arith.mulf %5, %18 : vector<16x32xf32>
    %20 = arith.truncf %19 : vector<16x32xf32> to vector<16x32xbf16>
    %c0_20 = arith.constant 0 : index
    %c0_21 = arith.constant 0 : index
    %21 = vector.load %arg10[%c0_20, %c0_21] : memref<16x32xbf16, #tpu.memory_space<vmem>>, vector<16x32xbf16>
    tpu.vector_store %arg10[%c0_20, %c0_21], %20 {strides = array<i32>} : memref<16x32xbf16, #tpu.memory_space<vmem>>, vector<16x32xbf16>,
    %22 = arith.truncf %11 : vector<16x32xf32> to vector<16x32xbf16>
    %c0_22 = arith.constant 0 : index
    %c0_23 = arith.constant 0 : index
    %23 = vector.load %arg11[%c0_22, %c0_23] : memref<16x32xbf16, #tpu.memory_space<vmem>>, vector<16x32xbf16>
    tpu.vector_store %arg11[%c0_22, %c0_23], %22 {strides = array<i32>} : memref<16x32xbf16, #tpu.memory_space<vmem>>, vector<16x32xbf16>,
    %24 = arith.truncf %17 : vector<16x32xf32> to vector<16x32xbf16>
    %c0_24 = arith.constant 0 : index
    %c0_25 = arith.constant 0 : index
    %25 = vector.load %arg12[%c0_24, %c0_25] : memref<16x32xbf16, #tpu.memory_space<vmem>>, vector<16x32xbf16>
    tpu.vector_store %arg12[%c0_24, %c0_25], %24 {strides = array<i32>} : memref<16x32xbf16, #tpu.memory_space<vmem>>, vector<16x32xbf16>,
    return
  }
  func.func @transform_0(%arg0: i32) -> (i32, i32) {
    %c0_i32 = arith.constant 0 : i32
    %c0_i32_0 = arith.constant 0 : i32
    return %arg0, %c0_i32 : i32, i32
  }
  func.func @transform_1(%arg0: i32) -> (i32, i32) {
    %c0_i32 = arith.constant 0 : i32
    %c0_i32_0 = arith.constant 0 : i32
    return %arg0, %c0_i32 : i32, i32
  }
  func.func @transform_2(%arg0: i32) -> (i32, i32) {
    %c0_i32 = arith.constant 0 : i32
    %c0_i32_0 = arith.constant 0 : i32
    return %arg0, %c0_i32 : i32, i32
  }
  func.func @transform_3(%arg0: i32) -> (i32, i32) {
    %c0_i32 = arith.constant 0 : i32
    %c0_i32_0 = arith.constant 0 : i32
    %c0_i32_1 = arith.constant 0 : i32
    return %c0_i32, %c0_i32_0 : i32, i32
  }
  func.func @transform_4(%arg0: i32) -> (i32, i32) {
    %c0_i32 = arith.constant 0 : i32
    %c0_i32_0 = arith.constant 0 : i32
    %c0_i32_1 = arith.constant 0 : i32
    return %c0_i32, %c0_i32_0 : i32, i32
  }
  func.func @transform_5(%arg0: i32) -> (i32, i32) {
    %c0_i32 = arith.constant 0 : i32
    %c0_i32_0 = arith.constant 0 : i32
    %c0_i32_1 = arith.constant 0 : i32
    return %c0_i32, %c0_i32_0 : i32, i32
  }
  func.func @transform_6(%arg0: i32) -> (i32, i32) {
    %c0_i32 = arith.constant 0 : i32
    %c0_i32_0 = arith.constant 0 : i32
    %c0_i32_1 = arith.constant 0 : i32
    return %c0_i32, %c0_i32_0 : i32, i32
  }
  func.func @transform_7(%arg0: i32) -> (i32, i32) {
    %c0_i32 = arith.constant 0 : i32
    %c0_i32_0 = arith.constant 0 : i32
    %c0_i32_1 = arith.constant 0 : i32
    return %c0_i32, %c0_i32_0 : i32, i32
  }
  func.func @transform_8(%arg0: i32) -> (i32, i32) {
    %c0_i32 = arith.constant 0 : i32
    %c0_i32_0 = arith.constant 0 : i32
    %c0_i32_1 = arith.constant 0 : i32
    return %c0_i32, %c0_i32_0 : i32, i32
  }
  func.func @transform_9(%arg0: i32) -> (i32, i32) {
    %c0_i32 = arith.constant 0 : i32
    %c0_i32_0 = arith.constant 0 : i32
    return %arg0, %c0_i32 : i32, i32
  }
  func.func @transform_10(%arg0: i32) -> (i32, i32) {
    %c0_i32 = arith.constant 0 : i32
    %c0_i32_0 = arith.constant 0 : i32
    return %arg0, %c0_i32 : i32, i32
  }
  func.func @transform_11(%arg0: i32) -> (i32, i32) {
    %c0_i32 = arith.constant 0 : i32
    %c0_i32_0 = arith.constant 0 : i32
    return %arg0, %c0_i32 : i32, i32
  }
}

</mosaic_0001>

<llo_original>
// kernel: tpu_custom_call.1
$region0: #{tpu_custom_call.1}
  #allocation0 [shape = 'u32[]', space=smem, size = 0x4, offset = 0x4, fixed_abs, tag = 'smem constant byte address 0x4 - core index']
  #allocation1 [shape = 'u32[144,128]{1,0:T(1,128)}', space=vmem, size = 0x12000, scoped, tag = 'internal scratch']
  %s0 = inlined_call_operand.hbm [shape: bf16[16,32], index: 0, kind: input, shape index: {}]
  %s1 = inlined_call_operand.hbm [shape: bf16[16,32], index: 1, kind: input, shape index: {}]
  %s2 = inlined_call_operand.hbm [shape: bf16[16,32], index: 2, kind: input, shape index: {}]
  %s3 = inlined_call_operand.hbm [shape: bf16[32,32], index: 3, kind: input, shape index: {}]
  %s4 = inlined_call_operand.vmem [shape: f32[1,32], index: 4, kind: input, shape index: {}]
  %s5 = inlined_call_operand.vmem [shape: bf16[32,32], index: 5, kind: input, shape index: {}]
  %s6 = inlined_call_operand.vmem [shape: f32[1,32], index: 6, kind: input, shape index: {}]
  %s7 = inlined_call_operand.hbm [shape: bf16[32,32], index: 7, kind: input, shape index: {}]
  %s8 = inlined_call_operand.vmem [shape: f32[1,32], index: 8, kind: input, shape index: {}]
  %s9 = inlined_call_operand.hbm [shape: bf16[16,32], index: 9, kind: output, shape index: {0}]
  %s10 = inlined_call_operand.hbm [shape: bf16[16,32], index: 10, kind: output, shape index: {1}]
  %s11 = inlined_call_operand.hbm [shape: bf16[16,32], index: 11, kind: output, shape index: {2}]
  %12 = xla_tuple %s9, %s10, %s11
  %s13 = sld [smem:[#allocation0]]
  $region82: #{tpu_custom_call.1} parent=0
    _
  %s15 = ssub.s32 1, %s13
  %s16 = scalar_select 0, %s15, %s13
  $region1: #{tpu_custom_call.1} parent=0
    #allocation2 [shape = 'u8[4096]{0}', space=vmem, size = 0x1000, scoped, tag = 'input window, operand 0, single buffered']
    #allocation3 [shape = 's32[1]{0}', space=sflag, size = 0x4, scoped, tag = 'scoped memory for tpu_custom_call.1']
    #allocation4 [shape = 's32[1]{0}', space=sflag, size = 0x4, scoped, tag = 'scoped memory for tpu_custom_call.1']
    #allocation5 [shape = 'u8[4096]{0}', space=vmem, size = 0x1000, scoped, tag = 'input window, operand 1, single buffered']
    #allocation6 [shape = 's32[1]{0}', space=sflag, size = 0x4, scoped, tag = 'scoped memory for tpu_custom_call.1']
    #allocation7 [shape = 'u8[4096]{0}', space=vmem, size = 0x1000, scoped, tag = 'input window, operand 2, single buffered']
    #allocation8 [shape = 'u8[8192]{0}', space=vmem, size = 0x2000, scoped, tag = 'input window, operand 3, single buffered']
    #allocation9 [shape = 's32[1]{0}', space=sflag, size = 0x4, scoped, tag = 'scoped memory for tpu_custom_call.1']
    #allocation10 [shape = 'u8[8192]{0}', space=vmem, size = 0x2000, scoped, tag = 'input window, operand 7, single buffered']
    #allocation11 [shape = 'u8[4096]{0}', space=vmem, size = 0x1000, scoped, tag = 'output window, operand 0, single buffered']
    #allocation12 [shape = 'u8[4096]{0}', space=vmem, size = 0x1000, scoped, tag = 'output window, operand 1, single buffered']
    #allocation13 [shape = 's32[1]{0}', space=sflag, size = 0x4, scoped, tag = 'scoped memory for tpu_custom_call.1']
    #allocation14 [shape = 'u8[4096]{0}', space=vmem, size = 0x1000, scoped, tag = 'output window, operand 2, single buffered']
    %17 = vsyncpa [#allocation3], 0
    %18 = vsyncpa [#allocation6], 0
    %19 = vsyncpa [#allocation9], 0
    %20 = vsyncpa [#allocation4], 0
    %21 = vsyncpa [#allocation13], 0
    // Predicated region
    $region2: #{tpu_custom_call.1} parent=1 // pred_check
      _
    $region3: #{tpu_custom_call.1} parent=1 // pred_check_branch
      %23 = sbr.rel (0) target = $region5
    $region4: #{tpu_custom_call.1} parent=1 // pred_region
      %s25 = ssub.s32 128, 128
      %26 = vsyncadd [#allocation3], %s25
      %s27 = sshll.u32 [#allocation2], 4
      %s28 = int_to_ptr.vmem [resolvable:$true] %s27
      %33 = dma.hbm_to_vmem [thread:$0]  %s0, 128, %s28, [#allocation3], 64, 64, 4
    $region5: #{tpu_custom_call.1} parent=1 // pred_fallthru
      _
    // Predicated region
    $region6: #{tpu_custom_call.1} parent=1 // pred_check
      _
    $region7: #{tpu_custom_call.1} parent=1 // pred_check_branch
      %35 = sbr.rel (0) target = $region9
    $region8: #{tpu_custom_call.1} parent=1 // pred_region
      %s37 = ssub.s32 128, 128
      %38 = vsyncadd [#allocation6], %s37
      %s39 = sshll.u32 [#allocation5], 4
      %s40 = int_to_ptr.vmem [resolvable:$true] %s39
      %45 = dma.hbm_to_vmem [thread:$0]  %s1, 128, %s40, [#allocation6], 64, 64, 4
    $region9: #{tpu_custom_call.1} parent=1 // pred_fallthru
      _
    // Predicated region
    $region10: #{tpu_custom_call.1} parent=1 // pred_check
      _
    $region11: #{tpu_custom_call.1} parent=1 // pred_check_branch
      %47 = sbr.rel (0) target = $region13
    $region12: #{tpu_custom_call.1} parent=1 // pred_region
      %s49 = ssub.s32 128, 128
      %50 = vsyncadd [#allocation6], %s49
      %s51 = sshll.u32 [#allocation7], 4
      %s52 = int_to_ptr.vmem [resolvable:$true] %s51
      %57 = dma.hbm_to_vmem [thread:$0]  %s2, 128, %s52, [#allocation6], 64, 64, 4
    $region13: #{tpu_custom_call.1} parent=1 // pred_fallthru
      _
    // Predicated region
    $region14: #{tpu_custom_call.1} parent=1 // pred_check
      _
    $region15: #{tpu_custom_call.1} parent=1 // pred_check_branch
      %59 = sbr.rel (0) target = $region17
    $region16: #{tpu_custom_call.1} parent=1 // pred_region
      %s61 = ssub.s32 256, 256
      %62 = vsyncadd [#allocation9], %s61
      %s63 = sshll.u32 [#allocation8], 4
      %s64 = int_to_ptr.vmem [resolvable:$true] %s63
      %69 = dma.hbm_to_vmem [thread:$0]  %s3, 256, %s64, [#allocation9], 64, 64, 4
    $region17: #{tpu_custom_call.1} parent=1 // pred_fallthru
      _
    // Predicated region
    $region18: #{tpu_custom_call.1} parent=1 // pred_check
      _
    $region19: #{tpu_custom_call.1} parent=1 // pred_check_branch
      %71 = sbr.rel (0) target = $region21
    $region20: #{tpu_custom_call.1} parent=1 // pred_region
      _
    $region21: #{tpu_custom_call.1} parent=1 // pred_fallthru
      _
    // Predicated region
    $region22: #{tpu_custom_call.1} parent=1 // pred_check
      _
    $region23: #{tpu_custom_call.1} parent=1 // pred_check_branch
      %73 = sbr.rel (0) target = $region25
    $region24: #{tpu_custom_call.1} parent=1 // pred_region
      _
    $region25: #{tpu_custom_call.1} parent=1 // pred_fallthru
      _
    // Predicated region
    $region26: #{tpu_custom_call.1} parent=1 // pred_check
      _
    $region27: #{tpu_custom_call.1} parent=1 // pred_check_branch
      %75 = sbr.rel (0) target = $region29
    $region28: #{tpu_custom_call.1} parent=1 // pred_region
      _
    $region29: #{tpu_custom_call.1} parent=1 // pred_fallthru
      _
    // Predicated region
    $region30: #{tpu_custom_call.1} parent=1 // pred_check
      _
    $region31: #{tpu_custom_call.1} parent=1 // pred_check_branch
      %77 = sbr.rel (0) target = $region33
    $region32: #{tpu_custom_call.1} parent=1 // pred_region
      %s79 = ssub.s32 256, 256
      %80 = vsyncadd [#allocation9], %s79
      %s81 = sshll.u32 [#allocation10], 4
      %s82 = int_to_ptr.vmem [resolvable:$true] %s81
      %87 = dma.hbm_to_vmem [thread:$0]  %s7, 256, %s82, [#allocation9], 64, 64, 4
    $region33: #{tpu_custom_call.1} parent=1 // pred_fallthru
      _
    // Predicated region
    $region34: #{tpu_custom_call.1} parent=1 // pred_check
      _
    $region35: #{tpu_custom_call.1} parent=1 // pred_check_branch
      %89 = sbr.rel (0) target = $region37
    $region36: #{tpu_custom_call.1} parent=1 // pred_region
      _
    $region37: #{tpu_custom_call.1} parent=1 // pred_fallthru
      _
    // Predicated region
    $region38: #{tpu_custom_call.1} parent=1 // pred_check
      _
    $region39: #{tpu_custom_call.1} parent=1 // pred_check_branch
      %91 = sbr.rel (0) target = $region41
    $region40: #{tpu_custom_call.1} parent=1 // pred_region
      %92 = dma.done [#allocation3], 128
    $region41: #{tpu_custom_call.1} parent=1 // pred_fallthru
      _
    // Predicated region
    $region42: #{tpu_custom_call.1} parent=1 // pred_check
      _
    $region43: #{tpu_custom_call.1} parent=1 // pred_check_branch
      %94 = sbr.rel (0) target = $region45
    $region44: #{tpu_custom_call.1} parent=1 // pred_region
      %95 = dma.done [#allocation6], 128
    $region45: #{tpu_custom_call.1} parent=1 // pred_fallthru
      _
    // Predicated region
    $region46: #{tpu_custom_call.1} parent=1 // pred_check
      _
    $region47: #{tpu_custom_call.1} parent=1 // pred_check_branch
      %97 = sbr.rel (0) target = $region49
    $region48: #{tpu_custom_call.1} parent=1 // pred_region
      %98 = dma.done [#allocation6], 128
    $region49: #{tpu_custom_call.1} parent=1 // pred_fallthru
      _
    // Predicated region
    $region50: #{tpu_custom_call.1} parent=1 // pred_check
      _
    $region51: #{tpu_custom_call.1} parent=1 // pred_check_branch
      %100 = sbr.rel (0) target = $region53
    $region52: #{tpu_custom_call.1} parent=1 // pred_region
      %101 = dma.done [#allocation9], 256
    $region53: #{tpu_custom_call.1} parent=1 // pred_fallthru
      _
    // Predicated region
    $region54: #{tpu_custom_call.1} parent=1 // pred_check
      _
    $region55: #{tpu_custom_call.1} parent=1 // pred_check_branch
      %103 = sbr.rel (0) target = $region57
    $region56: #{tpu_custom_call.1} parent=1 // pred_region
      %104 = dma.done [#allocation9], 256
    $region57: #{tpu_custom_call.1} parent=1 // pred_fallthru
      _
    %v106 = vld [vmem:[#allocation2] sm:$0xf]
    %v107 = vld [vmem:[#allocation2 + $0x4] sm:$0xf]
    %v108 = vld [vmem:[#allocation8] sm:$0xf]
    %v109 = vld [vmem:[#allocation8 + $0x4] sm:$0xf]
    %v110 = vld [vmem:[#allocation8 + $0x8] sm:$0xf]
    %v111 = vld [vmem:[#allocation8 + $0xc] sm:$0xf]
    %v112 = vld [vmem:[%s4] sm:$0x1]
    %v114 = vlaneseq
    %v115 = vshrl.u32 %v114, 7
    %v116 = vsub.s32 0, %v115
    %v117 = vrot.slane %v112, %v116
    %v121 = vunpack.c.l.b16 %v106
    %v122 = vunpack.c.l.b16 %v107
    %v123 = vpack.c.b16 %v122, %v121
    %v128 = vunpack.c.l.b16 %v108
    %v129 = vunpack.c.l.b16 %v109
    %v130 = vunpack.c.l.b16 %v110
    %v131 = vunpack.c.l.b16 %v111
    %v132 = vpack.c.b16 %v129, %v128
    %v133 = vpack.c.b16 %v131, %v130
    %vm136 = vcmask 261120
    %v138 = vsel %vm136, %v123, 0
    %140 = vmatprep.subr.bf16.mxu0 0
    %141 = vmatpush1.bf16.msra.mxu0 %v132
    %142 = vmatprep.subr.bf16.mxu0 0
    %143 = vmatpush1.bf16.msra.mxu0 %v133
    %144 = vmatprep.subr.bf16.mxu0 0
    %145 = vmatpush1.bf16.msra.mxu0 0
    %146 = vmatprep.subr.bf16.mxu0 0
    %147 = vmatpush1.bf16.msra.mxu0 0
    %148 = vmatprep.subr.bf16.mxu0 0
    %149 = vmatpush1.bf16.msra.mxu0 0
    %150 = vmatprep.subr.bf16.mxu0 0
    %151 = vmatpush1.bf16.msra.mxu0 0
    %152 = vmatprep.subr.bf16.mxu0 0
    %153 = vmatpush1.bf16.msra.mxu0 0
    %154 = vmatprep.subr.bf16.mxu0 0
    %155 = vmatpush1.bf16.msra.mxu0 0
    %156 = vmatprep.subr.bf16.mxu0 0
    %157 = vmatpush1.bf16.msra.mxu0 0
    %158 = vmatprep.subr.bf16.mxu0 0
    %159 = vmatpush1.bf16.msra.mxu0 0
    %160 = vmatprep.subr.bf16.mxu0 0
    %161 = vmatpush1.bf16.msra.mxu0 0
    %162 = vmatprep.subr.bf16.mxu0 0
    %163 = vmatpush1.bf16.msra.mxu0 0
    %164 = vmatprep.subr.bf16.mxu0 0
    %165 = vmatpush1.bf16.msra.mxu0 0
    %166 = vmatprep.subr.bf16.mxu0 0
    %167 = vmatpush1.bf16.msra.mxu0 0
    %168 = vmatprep.subr.bf16.mxu0 0
    %169 = vmatpush1.bf16.msra.mxu0 0
    %170 = vmatprep.subr.bf16.mxu0 0
    %171 = vmatpush1.bf16.msra.mxu0 0
    %172 = vmatprep.mubr.bf16.mxu0 0
    %173 = vmatmul.mubr.bf16.gmra.mrb[0].mxu0 %v138
    %v174 = vpop.f32.mrb[0].mxu0
    %v175 = vadd.f32 %v117, %v174
    %v176 = vpop.f32.mrb[0].mxu0
    %v177 = vpop.f32.mrb[0].mxu0
    %v178 = vadd.f32 %v117, %v177
    %v179 = vpop.f32.mrb[0].mxu0
    %180 = vdwg.mxu0
    %v181 = vld [vmem:[#allocation5] sm:$0xf]
    %v182 = vld [vmem:[#allocation5 + $0x4] sm:$0xf]
    %v183 = vld [vmem:[%s5] sm:$0xf]
    %v184 = vld [vmem:[%s5 + $0x4] sm:$0xf]
    %v185 = vld [vmem:[%s5 + $0x8] sm:$0xf]
    %v186 = vld [vmem:[%s5 + $0xc] sm:$0xf]
    %v187 = vld [vmem:[%s6] sm:$0x1]
    %v189 = vlaneseq
    %v190 = vshrl.u32 %v189, 7
    %v191 = vsub.s32 0, %v190
    %v192 = vrot.slane %v187, %v191
    %v196 = vunpack.c.l.b16 %v181
    %v197 = vunpack.c.l.b16 %v182
    %v198 = vpack.c.b16 %v197, %v196
    %v203 = vunpack.c.l.b16 %v183
    %v204 = vunpack.c.l.b16 %v184
    %v205 = vunpack.c.l.b16 %v185
    %v206 = vunpack.c.l.b16 %v186
    %v207 = vpack.c.b16 %v204, %v203
    %v208 = vpack.c.b16 %v206, %v205
    %v212 = vsel %vm136, %v198, 0
    %214 = vmatprep.subr.bf16.mxu0 0
    %215 = vmatpush1.bf16.msra.mxu0 %v207
    %216 = vmatprep.subr.bf16.mxu0 0
    %217 = vmatpush1.bf16.msra.mxu0 %v208
    %218 = vmatprep.subr.bf16.mxu0 0
    %219 = vmatpush1.bf16.msra.mxu0 0
    %220 = vmatprep.subr.bf16.mxu0 0
    %221 = vmatpush1.bf16.msra.mxu0 0
    %222 = vmatprep.subr.bf16.mxu0 0
    %223 = vmatpush1.bf16.msra.mxu0 0
    %224 = vmatprep.subr.bf16.mxu0 0
    %225 = vmatpush1.bf16.msra.mxu0 0
    %226 = vmatprep.subr.bf16.mxu0 0
    %227 = vmatpush1.bf16.msra.mxu0 0
    %228 = vmatprep.subr.bf16.mxu0 0
    %229 = vmatpush1.bf16.msra.mxu0 0
    %230 = vmatprep.subr.bf16.mxu0 0
    %231 = vmatpush1.bf16.msra.mxu0 0
    %232 = vmatprep.subr.bf16.mxu0 0
    %233 = vmatpush1.bf16.msra.mxu0 0
    %234 = vmatprep.subr.bf16.mxu0 0
    %235 = vmatpush1.bf16.msra.mxu0 0
    %236 = vmatprep.subr.bf16.mxu0 0
    %237 = vmatpush1.bf16.msra.mxu0 0
    %238 = vmatprep.subr.bf16.mxu0 0
    %239 = vmatpush1.bf16.msra.mxu0 0
    %240 = vmatprep.subr.bf16.mxu0 0
    %241 = vmatpush1.bf16.msra.mxu0 0
    %242 = vmatprep.subr.bf16.mxu0 0
    %243 = vmatpush1.bf16.msra.mxu0 0
    %244 = vmatprep.subr.bf16.mxu0 0
    %245 = vmatpush1.bf16.msra.mxu0 0
    %246 = vmatprep.mubr.bf16.mxu0 0
    %247 = vmatmul.mubr.bf16.gmra.mrb[0].mxu0 %v212
    %v248 = vpop.f32.mrb[0].mxu0
    %v249 = vadd.f32 %v192, %v248
    %v250 = vpop.f32.mrb[0].mxu0
    %v251 = vpop.f32.mrb[0].mxu0
    %v252 = vadd.f32 %v192, %v251
    %v253 = vpop.f32.mrb[0].mxu0
    %254 = vdwg.mxu0
    %v255 = vld [vmem:[#allocation7] sm:$0xf]
    %v256 = vld [vmem:[#allocation7 + $0x4] sm:$0xf]
    %v257 = vld [vmem:[#allocation10] sm:$0xf]
    %v258 = vld [vmem:[#allocation10 + $0x4] sm:$0xf]
    %v259 = vld [vmem:[#allocation10 + $0x8] sm:$0xf]
    %v260 = vld [vmem:[#allocation10 + $0xc] sm:$0xf]
    %v261 = vld [vmem:[%s8] sm:$0x1]
    %v263 = vlaneseq
    %v264 = vshrl.u32 %v263, 7
    %v265 = vsub.s32 0, %v264
    %v266 = vrot.slane %v261, %v265
    %v270 = vunpack.c.l.b16 %v255
    %v271 = vunpack.c.l.b16 %v256
    %v272 = vpack.c.b16 %v271, %v270
    %v277 = vunpack.c.l.b16 %v257
    %v278 = vunpack.c.l.b16 %v258
    %v279 = vunpack.c.l.b16 %v259
    %v280 = vunpack.c.l.b16 %v260
    %v281 = vpack.c.b16 %v278, %v277
    %v282 = vpack.c.b16 %v280, %v279
    %v286 = vsel %vm136, %v272, 0
    %288 = vmatprep.subr.bf16.mxu0 0
    %289 = vmatpush1.bf16.msra.mxu0 %v281
    %290 = vmatprep.subr.bf16.mxu0 0
    %291 = vmatpush1.bf16.msra.mxu0 %v282
    %292 = vmatprep.subr.bf16.mxu0 0
    %293 = vmatpush1.bf16.msra.mxu0 0
    %294 = vmatprep.subr.bf16.mxu0 0
    %295 = vmatpush1.bf16.msra.mxu0 0
    %296 = vmatprep.subr.bf16.mxu0 0
    %297 = vmatpush1.bf16.msra.mxu0 0
    %298 = vmatprep.subr.bf16.mxu0 0
    %299 = vmatpush1.bf16.msra.mxu0 0
    %300 = vmatprep.subr.bf16.mxu0 0
    %301 = vmatpush1.bf16.msra.mxu0 0
    %302 = vmatprep.subr.bf16.mxu0 0
    %303 = vmatpush1.bf16.msra.mxu0 0
    %304 = vmatprep.subr.bf16.mxu0 0
    %305 = vmatpush1.bf16.msra.mxu0 0
    %306 = vmatprep.subr.bf16.mxu0 0
    %307 = vmatpush1.bf16.msra.mxu0 0
    %308 = vmatprep.subr.bf16.mxu0 0
    %309 = vmatpush1.bf16.msra.mxu0 0
    %310 = vmatprep.subr.bf16.mxu0 0
    %311 = vmatpush1.bf16.msra.mxu0 0
    %312 = vmatprep.subr.bf16.mxu0 0
    %313 = vmatpush1.bf16.msra.mxu0 0
    %314 = vmatprep.subr.bf16.mxu0 0
    %315 = vmatpush1.bf16.msra.mxu0 0
    %316 = vmatprep.subr.bf16.mxu0 0
    %317 = vmatpush1.bf16.msra.mxu0 0
    %318 = vmatprep.subr.bf16.mxu0 0
    %319 = vmatpush1.bf16.msra.mxu0 0
    %320 = vmatprep.mubr.bf16.mxu0 0
    %321 = vmatmul.mubr.bf16.gmra.mrb[0].mxu0 %v286
    %v322 = vpop.f32.mrb[0].mxu0
    %v323 = vadd.f32 %v266, %v322
    %v324 = vpop.f32.mrb[0].mxu0
    %v325 = vpop.f32.mrb[0].mxu0
    %v326 = vadd.f32 %v266, %v325
    %v327 = vpop.f32.mrb[0].mxu0
    %328 = vdwg.mxu0
    %v329 = vmul.f32 %v175, 0.35355338
    %v330 = vmul.f32 %v178, 0.35355338
    %v331 = vpack.c.bf16 %v330, %v329
    %v333 = vunpack.c.l.b16 %v331
    %v334 = vunpack.c.h.b16 %v331
    %v335 = vpack.c.b16 %v333, %v333
    %v336 = vpack.c.b16 %v334, %v334
    %vm339 = vcmask 257024
    %340 = vst.msk [vmem:[#allocation11] sm:$0xf] %vm339, %v335
    %341 = vst.msk [vmem:[#allocation11 + $0x4] sm:$0xf] %vm339, %v336
    %v342 = vpack.c.bf16 %v252, %v249
    %v344 = vunpack.c.l.b16 %v342
    %v345 = vunpack.c.h.b16 %v342
    %v346 = vpack.c.b16 %v344, %v344
    %v347 = vpack.c.b16 %v345, %v345
    %350 = vst.msk [vmem:[#allocation12] sm:$0xf] %vm339, %v346
    %351 = vst.msk [vmem:[#allocation12 + $0x4] sm:$0xf] %vm339, %v347
    %v352 = vpack.c.bf16 %v326, %v323
    %v354 = vunpack.c.l.b16 %v352
    %v355 = vunpack.c.h.b16 %v352
    %v356 = vpack.c.b16 %v354, %v354
    %v357 = vpack.c.b16 %v355, %v355
    %360 = vst.msk [vmem:[#allocation14] sm:$0xf] %vm339, %v356
    %361 = vst.msk [vmem:[#allocation14 + $0x4] sm:$0xf] %vm339, %v357
    // Predicated region
    $region58: #{tpu_custom_call.1} parent=1 // pred_check
      _
    $region59: #{tpu_custom_call.1} parent=1 // pred_check_branch
      %363 = sbr.rel (0) target = $region61
    $region60: #{tpu_custom_call.1} parent=1 // pred_region
      %s365 = ssub.s32 128, 128
      %366 = vsyncadd [#allocation4], %s365
      %s367 = sshll.u32 [#allocation11], 4
      %s368 = int_to_ptr.vmem [resolvable:$true] %s367
      %373 = dma.vmem_to_hbm [thread:$0]  %s368, 128, %s9, [#allocation4], 64, 64, 4
    $region61: #{tpu_custom_call.1} parent=1 // pred_fallthru
      _
    // Predicated region
    $region62: #{tpu_custom_call.1} parent=1 // pred_check
      _
    $region63: #{tpu_custom_call.1} parent=1 // pred_check_branch
      %375 = sbr.rel (0) target = $region65
    $region64: #{tpu_custom_call.1} parent=1 // pred_region
      %s377 = ssub.s32 128, 128
      %378 = vsyncadd [#allocation13], %s377
      %s379 = sshll.u32 [#allocation12], 4
      %s380 = int_to_ptr.vmem [resolvable:$true] %s379
      %385 = dma.vmem_to_hbm [thread:$0]  %s380, 128, %s10, [#allocation13], 64, 64, 4
    $region65: #{tpu_custom_call.1} parent=1 // pred_fallthru
      _
    // Predicated region
    $region66: #{tpu_custom_call.1} parent=1 // pred_check
      _
    $region67: #{tpu_custom_call.1} parent=1 // pred_check_branch
      %387 = sbr.rel (0) target = $region69
    $region68: #{tpu_custom_call.1} parent=1 // pred_region
      %s389 = ssub.s32 128, 128
      %390 = vsyncadd [#allocation13], %s389
      %s391 = sshll.u32 [#allocation14], 4
      %s392 = int_to_ptr.vmem [resolvable:$true] %s391
      %397 = dma.vmem_to_hbm [thread:$0]  %s392, 128, %s11, [#allocation13], 64, 64, 4
    $region69: #{tpu_custom_call.1} parent=1 // pred_fallthru
      _
    // Predicated region
    $region70: #{tpu_custom_call.1} parent=1 // pred_check
      _
    $region71: #{tpu_custom_call.1} parent=1 // pred_check_branch
      %399 = sbr.rel (0) target = $region73
    $region72: #{tpu_custom_call.1} parent=1 // pred_region
      %400 = dma.done [#allocation4], 128
    $region73: #{tpu_custom_call.1} parent=1 // pred_fallthru
      _
    // Predicated region
    $region74: #{tpu_custom_call.1} parent=1 // pred_check
      _
    $region75: #{tpu_custom_call.1} parent=1 // pred_check_branch
      %402 = sbr.rel (0) target = $region77
    $region76: #{tpu_custom_call.1} parent=1 // pred_region
      %403 = dma.done [#allocation13], 128
    $region77: #{tpu_custom_call.1} parent=1 // pred_fallthru
      _
    // Predicated region
    $region78: #{tpu_custom_call.1} parent=1 // pred_check
      _
    $region79: #{tpu_custom_call.1} parent=1 // pred_check_branch
      %405 = sbr.rel (0) target = $region81
    $region80: #{tpu_custom_call.1} parent=1 // pred_region
      %406 = dma.done [#allocation13], 128
    $region81: #{tpu_custom_call.1} parent=1 // pred_fallthru
      _
    %407 = vsyncpa [#allocation3], 1
    %408 = vsyncpa [#allocation6], 1
    %409 = vsyncpa [#allocation9], 1
    %410 = vsyncpa [#allocation4], 1
    %411 = vsyncpa [#allocation13], 1

</llo_original>
